<compile_context>
chip_gen: v6e
topology: v6e:2x2x1
jax: 0.10.0
libtpu: 0.0.40
codegen_flags: <defaults>
</compile_context>

<pallas_src>
import functools

import jax
import jax.numpy as jnp
import numpy as np
from jax import lax
from jax.experimental import pallas as pl
from jax.experimental.pallas import tpu as pltpu


def _matmul_relu_kernel(p_ref, w_ref, o_ref, acc_ref, *, relu6):
    """p_ref: (TM, TK) bf16 im2col patch tile,
    w_ref:  (TK, TN) bf16 folded-weight tile,
    o_ref:  (TM, TN) output tile,
    acc_ref: (TM, TN) f32 accumulator (resident across the K grid axis)."""
    k = pl.program_id(2)

    @pl.when(k == 0)
    def _():
        acc_ref[...] = jnp.zeros_like(acc_ref)

    acc_ref[...] += jnp.dot(p_ref[...], w_ref[...],
                            preferred_element_type=jnp.float32)

    @pl.when(k == pl.num_programs(2) - 1)
    def _():
        out = jnp.maximum(acc_ref[...], 0.0)
        if relu6:
            out = jnp.minimum(out, 6.0)
        o_ref[...] = out.astype(o_ref.dtype)


def _round_up(x, m):
    return (x + m - 1) // m * m


def conv_relu(x_nchw, weight_oihw, *, stride=1, padding=0, dilation=1,
              groups=1, relu6=False, compute_dtype=jnp.bfloat16):
    """Pallas equivalent of ConvReLU.forward.

    x_nchw:      (B, Cin, H, W)
    weight_oihw: (Cout, Cin, KH, KW)   (nn.Conv2d weight layout, bias=False)
    returns:     (B, Cout, Ho, Wo)
    """
    assert groups == 1  # TODO(synk): grouped / depthwise conv not implemented
    B, Cin, H, W = x_nchw.shape
    Cout, _, KH, KW = weight_oihw.shape

    Ho = (H + 2 * padding - dilation * (KH - 1) - 1) // stride + 1
    Wo = (W + 2 * padding - dilation * (KW - 1) - 1) // stride + 1

    # ---- wrapper-side im2col (plain-JAX layout glue) -----------------------
    # Tap ordering along K is (kh, kw, cin); the weight fold below matches it.
    x_nhwc = jnp.transpose(x_nchw, (0, 2, 3, 1))            # (B, H, W, Cin)
    x_pad = jnp.pad(x_nhwc,
                    ((0, 0), (padding, padding), (padding, padding), (0, 0)))
    h_span = (Ho - 1) * stride + 1
    w_span = (Wo - 1) * stride + 1
    cols = []
    for kh in range(KH):
        for kw in range(KW):
            h0, w0 = kh * dilation, kw * dilation
            cols.append(x_pad[:, h0:h0 + h_span:stride,
                              w0:w0 + w_span:stride, :])    # (B, Ho, Wo, Cin)
    patches = jnp.concatenate(cols, axis=-1)                # (B, Ho, Wo, K)

    K = KH * KW * Cin
    M = B * Ho * Wo
    patches = patches.reshape(M, K)
    # OIHW -> (KH, KW, Cin, Cout) -> (K, Cout), matching the patch tap order.
    w = jnp.transpose(weight_oihw, (2, 3, 1, 0)).reshape(K, Cout)

    # ---- pad to lane/MXU-friendly tile sizes -------------------------------
    LANE = 128
    K_pad = _round_up(K, LANE)                    # contraction dim aligned
    Cout_pad = _round_up(Cout, LANE)              # lane-dense output
    TM = min(256, _round_up(M, 8))                # 256 rows: MXU-native M tile
    TN = 256 if Cout_pad % 256 == 0 else 128
    TK = 512 if K_pad % 512 == 0 else (256 if K_pad % 256 == 0 else 128)
    M_pad = _round_up(M, TM)

    patches = jnp.pad(patches,
                      ((0, M_pad - M), (0, K_pad - K))).astype(compute_dtype)
    w = jnp.pad(w, ((0, K_pad - K), (0, Cout_pad - Cout))).astype(compute_dtype)

    grid = (M_pad // TM, Cout_pad // TN, K_pad // TK)
    kernel = functools.partial(_matmul_relu_kernel, relu6=relu6)

    out_dtype = x_nchw.dtype
    cost = pl.CostEstimate(
        flops=2 * M_pad * K_pad * Cout_pad,
        transcendentals=0,
        bytes_accessed=(patches.size * patches.dtype.itemsize
                        + w.size * w.dtype.itemsize
                        + M_pad * Cout_pad * jnp.dtype(out_dtype).itemsize))

    out = pl.pallas_call(
        kernel,
        out_shape=jax.ShapeDtypeStruct((M_pad, Cout_pad), out_dtype),
        grid=grid,
        in_specs=[
            pl.BlockSpec((TM, TK), lambda m, n, k: (m, k)),   # patch tile
            pl.BlockSpec((TK, TN), lambda m, n, k: (k, n)),   # weight tile
        ],
        out_specs=pl.BlockSpec((TM, TN), lambda m, n, k: (m, n)),
        scratch_shapes=[pltpu.VMEM((TM, TN), jnp.float32)],
        compiler_params=pltpu.CompilerParams(
            dimension_semantics=("parallel", "parallel", "arbitrary"),
            vmem_limit_bytes=32 * 1024 * 1024),
        cost_estimate=cost,
    )(patches, w)

    # drop M / Cout zero-padding and restore NCHW (free wrapper reshapes).
    out = out[:M, :Cout].reshape(B, Ho, Wo, Cout)
    return jnp.transpose(out, (0, 3, 1, 2))


if __name__ == "__main__":
    # ConvReLU(in_channels=4, out_channels=8, kernel_size=3, stride=1, padding=1)
    B, Cin, H, W = 2, 4, 16, 16
    Cout, Ksz = 8, 3
    stride, padding, dilation = 1, 1, 1
    relu6 = False

    key = jax.random.PRNGKey(0)
    kx, kw = jax.random.split(key)
    x = jax.random.normal(kx, (B, Cin, H, W), dtype=jnp.float32)
    weight = 0.1 * jax.random.normal(kw, (Cout, Cin, Ksz, Ksz), dtype=jnp.float32)

    out = conv_relu(x, weight, stride=stride, padding=padding,
                    dilation=dilation, groups=1, relu6=relu6)
    out = jax.block_until_ready(out)

    # Reference: same bf16-rounded operands (the kernel feeds bf16 into the
    # MXU with f32 accumulation), convolved at highest precision.
    x_r = x.astype(jnp.bfloat16).astype(jnp.float32)
    w_r = weight.astype(jnp.bfloat16).astype(jnp.float32)
    ref = lax.conv_general_dilated(
        x_r, w_r,
        window_strides=(stride, stride),
        padding=[(padding, padding), (padding, padding)],
        rhs_dilation=(dilation, dilation),
        dimension_numbers=("NCHW", "OIHW", "NCHW"),
        precision=lax.Precision.HIGHEST)
    ref = jnp.maximum(ref, 0.0)
    if relu6:
        ref = jnp.minimum(ref, 6.0)

    np.testing.assert_allclose(np.asarray(out), np.asarray(ref),
                               rtol=1e-3, atol=1e-3)
    print("KERNEL_OK")
</pallas_src>

<mosaic_0001>
module attributes {stable_mosaic.version = 11 : i64} {
  func.func @_matmul_relu_kernel(%arg0: i32, %arg1: i32, %arg2: i32, %arg3: memref<256x128xbf16, #tpu.memory_space<vmem>>, %arg4: memref<128x128xbf16, #tpu.memory_space<vmem>>, %arg5: memref<256x128xf32, #tpu.memory_space<vmem>>, %arg6: memref<256x128xf32, #tpu.memory_space<vmem>>) attributes {dimension_semantics = [#tpu.dimension_semantics<parallel>, #tpu.dimension_semantics<parallel>, #tpu.dimension_semantics<arbitrary>], iteration_bounds = array<i64: 2, 1, 1>, scalar_prefetch = 0 : i64, scratch_operands = 1 : i64, tpu.core_type = #tpu.core_type<tc>, window_params = [{transform_indices = @transform_0, window_bounds = array<i64: 256, 128>}, {transform_indices = @transform_1, window_bounds = array<i64: 128, 128>}, {transform_indices = @transform_2, window_bounds = array<i64: 256, 128>}]} {
    %c0_i32 = arith.constant 0 : i32
    %0 = arith.cmpi eq, %arg2, %c0_i32 : i32
    %1 = arith.extui %0 : i1 to i32
    %c0_i32_0 = arith.constant 0 : i32
    %2 = arith.cmpi ne, %1, %c0_i32_0 : i32
    scf.if %2 {
      %cst_10 = arith.constant 0.000000e+00 : f32
      %12 = vector.broadcast %cst_10 : f32 to vector<256x128xf32>
      %c0_11 = arith.constant 0 : index
      %c0_12 = arith.constant 0 : index
      %13 = vector.load %arg6[%c0_11, %c0_12] : memref<256x128xf32, #tpu.memory_space<vmem>>, vector<256x128xf32>
      tpu.vector_store %arg6[%c0_11, %c0_12], %12 {strides = array<i32>} : memref<256x128xf32, #tpu.memory_space<vmem>>, vector<256x128xf32>,
    } else {
    }
    %c0 = arith.constant 0 : index
    %c0_1 = arith.constant 0 : index
    %3 = vector.load %arg6[%c0, %c0_1] : memref<256x128xf32, #tpu.memory_space<vmem>>, vector<256x128xf32>
    %c0_2 = arith.constant 0 : index
    %c0_3 = arith.constant 0 : index
    %4 = vector.load %arg3[%c0_2, %c0_3] : memref<256x128xbf16, #tpu.memory_space<vmem>>, vector<256x128xbf16>
    %c0_4 = arith.constant 0 : index
    %c0_5 = arith.constant 0 : index
    %5 = vector.load %arg4[%c0_4, %c0_5] : memref<128x128xbf16, #tpu.memory_space<vmem>>, vector<128x128xbf16>
    %cst = arith.constant dense<0.000000e+00> : vector<256x128xf32>
    %6 = tpu.matmul %4, %5, %cst {dimension_numbers = #tpu.dot_dimension_numbers<[1], [0], [0], [1], [0, 0, 1, 1], [], []>} : vector<256x128xbf16>, vector<128x128xbf16>, vector<256x128xf32> -> vector<256x128xf32>
    %7 = arith.addf %3, %6 : vector<256x128xf32>
    %c0_6 = arith.constant 0 : index
    %c0_7 = arith.constant 0 : index
    %8 = vector.load %arg6[%c0_6, %c0_7] : memref<256x128xf32, #tpu.memory_space<vmem>>, vector<256x128xf32>
    tpu.vector_store %arg6[%c0_6, %c0_7], %7 {strides = array<i32>} : memref<256x128xf32, #tpu.memory_space<vmem>>, vector<256x128xf32>,
    %c0_i32_8 = arith.constant 0 : i32
    %9 = arith.cmpi eq, %arg2, %c0_i32_8 : i32
    %10 = arith.extui %9 : i1 to i32
    %c0_i32_9 = arith.constant 0 : i32
    %11 = arith.cmpi ne, %10, %c0_i32_9 : i32
    scf.if %11 {
      %c0_10 = arith.constant 0 : index
      %c0_11 = arith.constant 0 : index
      %12 = vector.load %arg6[%c0_10, %c0_11] : memref<256x128xf32, #tpu.memory_space<vmem>>, vector<256x128xf32>
      %cst_12 = arith.constant 0.000000e+00 : f32
      %13 = vector.broadcast %cst_12 : f32 to vector<256x128xf32>
      %14 = arith.maximumf %12, %13 : vector<256x128xf32>
      %c0_13 = arith.constant 0 : index
      %c0_14 = arith.constant 0 : index
      %15 = vector.load %arg5[%c0_13, %c0_14] : memref<256x128xf32, #tpu.memory_space<vmem>>, vector<256x128xf32>
      tpu.vector_store %arg5[%c0_13, %c0_14], %14 {strides = array<i32>} : memref<256x128xf32, #tpu.memory_space<vmem>>, vector<256x128xf32>,
    } else {
    }
    return
  }
  func.func @transform_0(%arg0: i32, %arg1: i32, %arg2: i32) -> (i32, i32) {
    %c0_i32 = arith.constant 0 : i32
    return %arg0, %arg2 : i32, i32
  }
  func.func @transform_1(%arg0: i32, %arg1: i32, %arg2: i32) -> (i32, i32) {
    %c0_i32 = arith.constant 0 : i32
    return %arg2, %arg1 : i32, i32
  }
  func.func @transform_2(%arg0: i32, %arg1: i32, %arg2: i32) -> (i32, i32) {
    %c0_i32 = arith.constant 0 : i32
    return %arg0, %arg1 : i32, i32
  }
}

</mosaic_0001>

<llo_original>
// kernel: tpu_custom_call.1
$region0: #{tpu_custom_call.1}
  #allocation0 [shape = 'u32[]', space=smem, size = 0x4, offset = 0x4, fixed_abs, tag = 'smem constant byte address 0x4 - core index']
  #allocation1 [shape = 'u32[144,128]{1,0:T(1,128)}', space=vmem, size = 0x12000, scoped, tag = 'internal scratch']
  #allocation2 [shape = 'f32[256,128]{1,0:T(8,128)}', space=vmem, size = 0x20000, scoped, tag = 'scratch operand']
  %s0 = inlined_call_operand.hbm [shape: bf16[512,128], index: 0, kind: input, shape index: {}]
  %s1 = inlined_call_operand.hbm [shape: bf16[128,128], index: 1, kind: input, shape index: {}]
  %s2 = inlined_call_operand.hbm [shape: f32[512,128], index: 2, kind: output, shape index: {}]
  %s3 = sld [smem:[#allocation0]]
  $region57: #{tpu_custom_call.1} parent=0
    _
  %s5 = ssub.s32 1, %s3
  %s6 = scalar_select 0, %s5, %s3
  $region1: #{tpu_custom_call.1} parent=0
    #allocation3 [shape = 'u8[131072]{0}', space=vmem, size = 0x20000, scoped, tag = 'input window, operand 0']
    #allocation4 [shape = 's32[2]{0}', space=sflag, size = 0x8, scoped, tag = 'scoped memory for tpu_custom_call.1']
    #allocation5 [shape = 's32[2]{0}', space=sflag, size = 0x8, scoped, tag = 'scoped memory for tpu_custom_call.1']
    #allocation6 [shape = 'u8[32768]{0}', space=vmem, size = 0x8000, scoped, tag = 'input window, operand 1, single buffered']
    #allocation7 [shape = 's32[1]{0}', space=sflag, size = 0x4, scoped, tag = 'scoped memory for tpu_custom_call.1']
    #allocation8 [shape = 'u8[262144]{0}', space=vmem, size = 0x40000, scoped, tag = 'output window, operand 0']
    %7 = vsyncpa [#allocation4], 0
    %s8 = scalar_lea.sflag [#allocation4], 1
    %9 = vsyncpa %s8, 0
    %10 = vsyncpa [#allocation7], 0
    %11 = vsyncpa [#allocation5], 0
    %s12 = scalar_lea.sflag [#allocation5], 1
    %13 = vsyncpa %s12, 0
    loop: start=0, step=1, limit=4
    $region2: #{tpu_custom_call.1} parent=1 // loop_pre_header
      _
    $region3: #{tpu_custom_call.1} parent=1 // loop_header
      %s15 = sphi 0, %s19
      %p16 = scmp.ge.s32.totalorder %s15, 4
      %s22 = sphi 0, %s41
      %s23 = sphi 0, %s37
      %s24 = sphi 0, %s33
      %s25 = sphi 0, %s22
      %s26 = sphi 0, %s23
      %s27 = sphi 0, %s24
      %s28 = sphi 0, %s25
      %s29 = sphi 0, %s26
      %s30 = sphi 0, %s27
      %s46 = sphi 0, %s48
      %s49 = sphi 0, %s46
      %s50 = sphi 0, %s49
      %s66 = sphi 0, %s50
      %s74 = sphi 0, %s76
      %s77 = sphi 0, %s74
      %s78 = sphi 0, %s77
      %s94 = sphi 0, %s78
      %s102 = sphi 0, %s104
      %s105 = sphi 0, %s102
      %s106 = sphi 0, %s105
      %s122 = sphi 0, %s106
    $region4: #{tpu_custom_call.1} parent=1 // loop_header_branch
      %18 = sbr.rel (%p16) target = $region8
    $region5: #{tpu_custom_call.1} parent=1 // loop_body
      %s20 = ssub.s32 %s15, 1
      %s21 = ssub.s32 %s15, 2
      %s31 = sadd.s32 1, %s24
      %p32 = scmp.ge.s32.totalorder %s31, 1
      %s33 = scalar_select %p32, 0, %s31
      %s34 = sadd.s32 1, %s23
      %s35 = scalar_select %p32, %s34, %s23
      %p36 = scmp.ge.s32.totalorder %s35, 1
      %s37 = scalar_select %p36, 0, %s35
      %s38 = sadd.s32 1, %s22
      %s39 = scalar_select %p36, %s38, %s22
      %p40 = scmp.ge.s32.totalorder %s39, 2
      %s41 = scalar_select %p40, 0, %s39
      %s42 = ssub.s32 %s22, %s41
      %s43 = ssub.s32 %s24, %s33
      %s44 = sor.u32 %s42, %s43
      %p45 = scmp.eq.s32.totalorder %s44, 0
      %s47 = sadd.s32 %s46, 1
      %s48 = scalar_select %p45, %s46, %s47
      %p51 = pneg %p45
      %p52 = scmp.eq.s32.totalorder %s15, 1
      %p53 = por %p51, %p52
      %p54 = scmp.ne.s32.totalorder %s46, %s49
      %p55 = scmp.eq.s32.totalorder %s15, 0
      %p56 = por %p54, %p55
      %p57 = scmp.ne.s32.totalorder %s46, %s49
      %p58 = scmp.eq.s32.totalorder %s20, 1
      %p59 = por %p57, %p58
      %p60 = scmp.ne.s32.totalorder %s49, %s50
      %p61 = scmp.eq.s32.totalorder %s20, 0
      %p62 = por %p60, %p61
      %p63 = scmp.ne.s32.totalorder %s49, %s50
      %p64 = scmp.eq.s32.totalorder %s21, 1
      %p65 = por %p63, %p64
      %p67 = scmp.ne.s32.totalorder %s50, %s66
      %p68 = scmp.eq.s32.totalorder %s21, 0
      %p69 = por %p67, %p68
      %s70 = ssub.s32 %s24, %s33
      %s71 = ssub.s32 %s23, %s37
      %s72 = sor.u32 %s70, %s71
      %p73 = scmp.eq.s32.totalorder %s72, 0
      %s75 = sadd.s32 %s74, 1
      %s76 = scalar_select %p73, %s74, %s75
      %p79 = pneg %p73
      %p80 = scmp.eq.s32.totalorder %s15, 1
      %p81 = por %p79, %p80
      %p82 = scmp.ne.s32.totalorder %s74, %s77
      %p83 = scmp.eq.s32.totalorder %s15, 0
      %p84 = por %p82, %p83
      %p85 = scmp.ne.s32.totalorder %s74, %s77
      %p86 = scmp.eq.s32.totalorder %s20, 1
      %p87 = por %p85, %p86
      %p88 = scmp.ne.s32.totalorder %s77, %s78
      %p89 = scmp.eq.s32.totalorder %s20, 0
      %p90 = por %p88, %p89
      %p91 = scmp.ne.s32.totalorder %s77, %s78
      %p92 = scmp.eq.s32.totalorder %s21, 1
      %p93 = por %p91, %p92
      %p95 = scmp.ne.s32.totalorder %s78, %s94
      %p96 = scmp.eq.s32.totalorder %s21, 0
      %p97 = por %p95, %p96
      %s98 = ssub.s32 %s22, %s41
      %s99 = ssub.s32 %s23, %s37
      %s100 = sor.u32 %s98, %s99
      %p101 = scmp.eq.s32.totalorder %s100, 0
      %s103 = sadd.s32 %s102, 1
      %s104 = scalar_select %p101, %s102, %s103
      %p107 = pneg %p101
      %p108 = scmp.eq.s32.totalorder %s15, 1
      %p109 = por %p107, %p108
      %p110 = scmp.ne.s32.totalorder %s102, %s105
      %p111 = scmp.eq.s32.totalorder %s15, 0
      %p112 = por %p110, %p111
      %p113 = scmp.ne.s32.totalorder %s102, %s105
      %p114 = scmp.eq.s32.totalorder %s20, 1
      %p115 = por %p113, %p114
      %p116 = scmp.ne.s32.totalorder %s105, %s106
      %p117 = scmp.eq.s32.totalorder %s20, 0
      %p118 = por %p116, %p117
      %p119 = scmp.ne.s32.totalorder %s105, %s106
      %p120 = scmp.eq.s32.totalorder %s21, 1
      %p121 = por %p119, %p120
      %p123 = scmp.ne.s32.totalorder %s106, %s122
      %p124 = scmp.eq.s32.totalorder %s21, 0
      %p125 = por %p123, %p124
      %p126 = scmp.le.s32.totalorder 1, %s15
      %p127 = scmp.lt.s32.totalorder %s15, 3
      %p128 = pnand %p126, %p127
      %p129 = pneg %p128
      // Predicated region
      $region9: #{tpu_custom_call.1} parent=5 // pred_check
        _
      $region10: #{tpu_custom_call.1} parent=5 // pred_check_branch
        %131 = sbr.rel (%p128) target = $region12
      $region11: #{tpu_custom_call.1} parent=5 // pred_region
        %s132 = ssub.s32 %s15, 1
        // Predicated region
        $region13: #{tpu_custom_call.1} parent=11 // pred_check
          %p133 = pneg %p90
        $region14: #{tpu_custom_call.1} parent=11 // pred_check_branch
          %135 = sbr.rel (%p133) target = $region16
        $region15: #{tpu_custom_call.1} parent=11 // pred_region
          %s136 = smul.u32 16, %s27
          %s138 = ssub.s32 1024, 1024
          %139 = vsyncadd [#allocation7], %s138
          %s140 = sadd.s32 %s26, %s136
          %s141 = smul.addr %s140, 64
          %s142 = scalar_lea.hbm %s1, %s141
          %s143 = sshll.u32 [#allocation6], 4
          %s144 = int_to_ptr.vmem [resolvable:$true] %s143
          %149 = dma.hbm_to_vmem [thread:$0]  %s142, 1024, %s144, [#allocation7], 64, 64, 4
        $region16: #{tpu_custom_call.1} parent=11 // pred_fallthru
          _
      $region12: #{tpu_custom_call.1} parent=5 // pred_fallthru
        _
      %p150 = scmp.lt.s32.totalorder %s15, 2
      // Predicated region
      $region17: #{tpu_custom_call.1} parent=5 // pred_check
        %p151 = pneg %p150
      $region18: #{tpu_custom_call.1} parent=5 // pred_check_branch
        %153 = sbr.rel (%p151) target = $region20
      $region19: #{tpu_custom_call.1} parent=5 // pred_region
        // Predicated region
        $region21: #{tpu_custom_call.1} parent=19 // pred_check
          %p154 = pneg %p56
        $region22: #{tpu_custom_call.1} parent=19 // pred_check_branch
          %156 = sbr.rel (%p154) target = $region24
        $region23: #{tpu_custom_call.1} parent=19 // pred_region
          %s157 = sand.u32 %s46, 1
          %s158 = scalar_lea.sflag [#allocation4], %s157
          %s159 = sand.u32 %s46, 1
          %s160 = smul.addr %s159, 128
          %s161 = scalar_lea.vmem [#allocation3], %s160
          %s162 = smul.u32 32, %s22
          %s164 = ssub.s32 2048, 2048
          %165 = vsyncadd %s158, %s164
          %s166 = sadd.s32 %s24, %s162
          %s167 = smul.addr %s166, 64
          %s168 = scalar_lea.hbm %s0, %s167
          %s169 = sshll.u32 %s161, 4
          %s170 = int_to_ptr.vmem [resolvable:$true] %s169
          %175 = dma.hbm_to_vmem [thread:$0]  %s168, 2048, %s170, %s158, 64, 64, 4
        $region24: #{tpu_custom_call.1} parent=19 // pred_fallthru
          _
      $region20: #{tpu_custom_call.1} parent=5 // pred_fallthru
        _
      %p176 = scmp.le.s32.totalorder 1, %s15
      %p177 = scmp.lt.s32.totalorder %s15, 3
      %p178 = pnand %p176, %p177
      %p179 = pneg %p178
      // Predicated region
      $region25: #{tpu_custom_call.1} parent=5 // pred_check
        _
      $region26: #{tpu_custom_call.1} parent=5 // pred_check_branch
        %181 = sbr.rel (%p178) target = $region28
      $region27: #{tpu_custom_call.1} parent=5 // pred_region
        %s182 = ssub.s32 %s15, 1
        %s183 = sand.u32 %s49, 1
        %s184 = scalar_lea.sflag [#allocation4], %s183
        %s185 = sand.u32 %s49, 1
        %s186 = smul.addr %s185, 128
        %s187 = scalar_lea.vmem [#allocation3], %s186
        // Predicated region
        $region29: #{tpu_custom_call.1} parent=27 // pred_check
          %p188 = pneg %p62
        $region30: #{tpu_custom_call.1} parent=27 // pred_check_branch
          %190 = sbr.rel (%p188) target = $region32
        $region31: #{tpu_custom_call.1} parent=27 // pred_region
          %191 = dma.done %s184, 2048
        $region32: #{tpu_custom_call.1} parent=27 // pred_fallthru
          _
        // Predicated region
        $region33: #{tpu_custom_call.1} parent=27 // pred_check
          %p192 = pneg %p90
        $region34: #{tpu_custom_call.1} parent=27 // pred_check_branch
          %194 = sbr.rel (%p192) target = $region36
        $region35: #{tpu_custom_call.1} parent=27 // pred_region
          %195 = dma.done [#allocation7], 1024
        $region36: #{tpu_custom_call.1} parent=27 // pred_fallthru
          _
        %s196 = sand.u32 %s49, 1
        %s197 = scalar_lea.sflag [#allocation4], %s196
        %s198 = sand.u32 %s49, 1
        %s199 = smul.addr %s198, 128
        %s200 = scalar_lea.vmem [#allocation3], %s199
        %p201 = pneg %p62
        %p202 = pneg %p59
        %p203 = pneg %p90
        %p204 = pneg %p87
        %p205 = pneg %p118
        %p206 = pneg %p115
        %s207 = sand.u32 %s105, 1
        %s208 = scalar_lea.sflag [#allocation5], %s207
        %s209 = sand.u32 %s105, 1
        %s210 = smul.addr %s209, 256
        %s211 = scalar_lea.vmem [#allocation8], %s210
        %s212 = smul.u32 32, %s25
        %s213 = smul.u32 16, %s27
        %s214 = smul.u32 32, %s25
        %p216 = scmp.eq.s32.totalorder %s27, 0
        // Predicated region
        $region37: #{tpu_custom_call.1} parent=27 // pred_check
          %p217 = pneg %p216
        $region38: #{tpu_custom_call.1} parent=27 // pred_check_branch
          %219 = sbr.rel (%p217) target = $region40
        $region39: #{tpu_custom_call.1} parent=27 // pred_region
          %220 = vst [vmem:[#allocation2] sm:$0xff] 0.0
          %221 = vst [vmem:[#allocation2 + $0x8] sm:$0xff] 0.0
          %222 = vst [vmem:[#allocation2 + $0x10] sm:$0xff] 0.0
          %223 = vst [vmem:[#allocation2 + $0x18] sm:$0xff] 0.0
          %224 = vst [vmem:[#allocation2 + $0x20] sm:$0xff] 0.0
          %225 = vst [vmem:[#allocation2 + $0x28] sm:$0xff] 0.0
          %226 = vst [vmem:[#allocation2 + $0x30] sm:$0xff] 0.0
          %227 = vst [vmem:[#allocation2 + $0x38] sm:$0xff] 0.0
          %228 = vst [vmem:[#allocation2 + $0x40] sm:$0xff] 0.0
          %229 = vst [vmem:[#allocation2 + $0x48] sm:$0xff] 0.0
          %230 = vst [vmem:[#allocation2 + $0x50] sm:$0xff] 0.0
          %231 = vst [vmem:[#allocation2 + $0x58] sm:$0xff] 0.0
          %232 = vst [vmem:[#allocation2 + $0x60] sm:$0xff] 0.0
          %233 = vst [vmem:[#allocation2 + $0x68] sm:$0xff] 0.0
          %234 = vst [vmem:[#allocation2 + $0x70] sm:$0xff] 0.0
          %235 = vst [vmem:[#allocation2 + $0x78] sm:$0xff] 0.0
          %236 = vst [vmem:[#allocation2 + $0x80] sm:$0xff] 0.0
          %237 = vst [vmem:[#allocation2 + $0x88] sm:$0xff] 0.0
          %238 = vst [vmem:[#allocation2 + $0x90] sm:$0xff] 0.0
          %239 = vst [vmem:[#allocation2 + $0x98] sm:$0xff] 0.0
          %240 = vst [vmem:[#allocation2 + $0xa0] sm:$0xff] 0.0
          %241 = vst [vmem:[#allocation2 + $0xa8] sm:$0xff] 0.0
          %242 = vst [vmem:[#allocation2 + $0xb0] sm:$0xff] 0.0
          %243 = vst [vmem:[#allocation2 + $0xb8] sm:$0xff] 0.0
          %244 = vst [vmem:[#allocation2 + $0xc0] sm:$0xff] 0.0
          %245 = vst [vmem:[#allocation2 + $0xc8] sm:$0xff] 0.0
          %246 = vst [vmem:[#allocation2 + $0xd0] sm:$0xff] 0.0
          %247 = vst [vmem:[#allocation2 + $0xd8] sm:$0xff] 0.0
          %248 = vst [vmem:[#allocation2 + $0xe0] sm:$0xff] 0.0
          %249 = vst [vmem:[#allocation2 + $0xe8] sm:$0xff] 0.0
          %250 = vst [vmem:[#allocation2 + $0xf0] sm:$0xff] 0.0
          %251 = vst [vmem:[#allocation2 + $0xf8] sm:$0xff] 0.0
        $region40: #{tpu_custom_call.1} parent=27 // pred_fallthru
          _
        %v252 = vld [vmem:[#allocation2] sm:$0xff]
        %v253 = vld [vmem:[#allocation2 + $0x8] sm:$0xff]
        %v254 = vld [vmem:[#allocation2 + $0x10] sm:$0xff]
        %v255 = vld [vmem:[#allocation2 + $0x18] sm:$0xff]
        %v256 = vld [vmem:[#allocation2 + $0x20] sm:$0xff]
        %v257 = vld [vmem:[#allocation2 + $0x28] sm:$0xff]
        %v258 = vld [vmem:[#allocation2 + $0x30] sm:$0xff]
        %v259 = vld [vmem:[#allocation2 + $0x38] sm:$0xff]
        %v260 = vld [vmem:[#allocation2 + $0x40] sm:$0xff]
        %v261 = vld [vmem:[#allocation2 + $0x48] sm:$0xff]
        %v262 = vld [vmem:[#allocation2 + $0x50] sm:$0xff]
        %v263 = vld [vmem:[#allocation2 + $0x58] sm:$0xff]
        %v264 = vld [vmem:[#allocation2 + $0x60] sm:$0xff]
        %v265 = vld [vmem:[#allocation2 + $0x68] sm:$0xff]
        %v266 = vld [vmem:[#allocation2 + $0x70] sm:$0xff]
        %v267 = vld [vmem:[#allocation2 + $0x78] sm:$0xff]
        %v268 = vld [vmem:[#allocation2 + $0x80] sm:$0xff]
        %v269 = vld [vmem:[#allocation2 + $0x88] sm:$0xff]
        %v270 = vld [vmem:[#allocation2 + $0x90] sm:$0xff]
        %v271 = vld [vmem:[#allocation2 + $0x98] sm:$0xff]
        %v272 = vld [vmem:[#allocation2 + $0xa0] sm:$0xff]
        %v273 = vld [vmem:[#allocation2 + $0xa8] sm:$0xff]
        %v274 = vld [vmem:[#allocation2 + $0xb0] sm:$0xff]
        %v275 = vld [vmem:[#allocation2 + $0xb8] sm:$0xff]
        %v276 = vld [vmem:[#allocation2 + $0xc0] sm:$0xff]
        %v277 = vld [vmem:[#allocation2 + $0xc8] sm:$0xff]
        %v278 = vld [vmem:[#allocation2 + $0xd0] sm:$0xff]
        %v279 = vld [vmem:[#allocation2 + $0xd8] sm:$0xff]
        %v280 = vld [vmem:[#allocation2 + $0xe0] sm:$0xff]
        %v281 = vld [vmem:[#allocation2 + $0xe8] sm:$0xff]
        %v282 = vld [vmem:[#allocation2 + $0xf0] sm:$0xff]
        %v283 = vld [vmem:[#allocation2 + $0xf8] sm:$0xff]
        %v284 = vld [vmem:[%s187] sm:$0xf]
        %v285 = vld [vmem:[%s187 + $0x4] sm:$0xf]
        %v286 = vld [vmem:[%s187 + $0x8] sm:$0xf]
        %v287 = vld [vmem:[%s187 + $0xc] sm:$0xf]
        %v288 = vld [vmem:[%s187 + $0x10] sm:$0xf]
        %v289 = vld [vmem:[%s187 + $0x14] sm:$0xf]
        %v290 = vld [vmem:[%s187 + $0x18] sm:$0xf]
        %v291 = vld [vmem:[%s187 + $0x1c] sm:$0xf]
        %v292 = vld [vmem:[%s187 + $0x20] sm:$0xf]
        %v293 = vld [vmem:[%s187 + $0x24] sm:$0xf]
        %v294 = vld [vmem:[%s187 + $0x28] sm:$0xf]
        %v295 = vld [vmem:[%s187 + $0x2c] sm:$0xf]
        %v296 = vld [vmem:[%s187 + $0x30] sm:$0xf]
        %v297 = vld [vmem:[%s187 + $0x34] sm:$0xf]
        %v298 = vld [vmem:[%s187 + $0x38] sm:$0xf]
        %v299 = vld [vmem:[%s187 + $0x3c] sm:$0xf]
        %v300 = vld [vmem:[%s187 + $0x40] sm:$0xf]
        %v301 = vld [vmem:[%s187 + $0x44] sm:$0xf]
        %v302 = vld [vmem:[%s187 + $0x48] sm:$0xf]
        %v303 = vld [vmem:[%s187 + $0x4c] sm:$0xf]
        %v304 = vld [vmem:[%s187 + $0x50] sm:$0xf]
        %v305 = vld [vmem:[%s187 + $0x54] sm:$0xf]
        %v306 = vld [vmem:[%s187 + $0x58] sm:$0xf]
        %v307 = vld [vmem:[%s187 + $0x5c] sm:$0xf]
        %v308 = vld [vmem:[%s187 + $0x60] sm:$0xf]
        %v309 = vld [vmem:[%s187 + $0x64] sm:$0xf]
        %v310 = vld [vmem:[%s187 + $0x68] sm:$0xf]
        %v311 = vld [vmem:[%s187 + $0x6c] sm:$0xf]
        %v312 = vld [vmem:[%s187 + $0x70] sm:$0xf]
        %v313 = vld [vmem:[%s187 + $0x74] sm:$0xf]
        %v314 = vld [vmem:[%s187 + $0x78] sm:$0xf]
        %v315 = vld [vmem:[%s187 + $0x7c] sm:$0xf]
        %v316 = vld [vmem:[#allocation6] sm:$0xf]
        %v317 = vld [vmem:[#allocation6 + $0x4] sm:$0xf]
        %v318 = vld [vmem:[#allocation6 + $0x8] sm:$0xf]
        %v319 = vld [vmem:[#allocation6 + $0xc] sm:$0xf]
        %v320 = vld [vmem:[#allocation6 + $0x10] sm:$0xf]
        %v321 = vld [vmem:[#allocation6 + $0x14] sm:$0xf]
        %v322 = vld [vmem:[#allocation6 + $0x18] sm:$0xf]
        %v323 = vld [vmem:[#allocation6 + $0x1c] sm:$0xf]
        %v324 = vld [vmem:[#allocation6 + $0x20] sm:$0xf]
        %v325 = vld [vmem:[#allocation6 + $0x24] sm:$0xf]
        %v326 = vld [vmem:[#allocation6 + $0x28] sm:$0xf]
        %v327 = vld [vmem:[#allocation6 + $0x2c] sm:$0xf]
        %v328 = vld [vmem:[#allocation6 + $0x30] sm:$0xf]
        %v329 = vld [vmem:[#allocation6 + $0x34] sm:$0xf]
        %v330 = vld [vmem:[#allocation6 + $0x38] sm:$0xf]
        %v331 = vld [vmem:[#allocation6 + $0x3c] sm:$0xf]
        %v364 = vunpack.c.l.b16 %v284
        %v365 = vunpack.c.l.b16 %v285
        %v366 = vunpack.c.l.b16 %v286
        %v367 = vunpack.c.l.b16 %v287
        %v368 = vunpack.c.l.b16 %v288
        %v369 = vunpack.c.l.b16 %v289
        %v370 = vunpack.c.l.b16 %v290
        %v371 = vunpack.c.l.b16 %v291
        %v372 = vunpack.c.l.b16 %v292
        %v373 = vunpack.c.l.b16 %v293
        %v374 = vunpack.c.l.b16 %v294
        %v375 = vunpack.c.l.b16 %v295
        %v376 = vunpack.c.l.b16 %v296
        %v377 = vunpack.c.l.b16 %v297
        %v378 = vunpack.c.l.b16 %v298
        %v379 = vunpack.c.l.b16 %v299
        %v380 = vunpack.c.l.b16 %v300
        %v381 = vunpack.c.l.b16 %v301
        %v382 = vunpack.c.l.b16 %v302
        %v383 = vunpack.c.l.b16 %v303
        %v384 = vunpack.c.l.b16 %v304
        %v385 = vunpack.c.l.b16 %v305
        %v386 = vunpack.c.l.b16 %v306
        %v387 = vunpack.c.l.b16 %v307
        %v388 = vunpack.c.l.b16 %v308
        %v389 = vunpack.c.l.b16 %v309
        %v390 = vunpack.c.l.b16 %v310
        %v391 = vunpack.c.l.b16 %v311
        %v392 = vunpack.c.l.b16 %v312
        %v393 = vunpack.c.l.b16 %v313
        %v394 = vunpack.c.l.b16 %v314
        %v395 = vunpack.c.l.b16 %v315
        %v396 = vpack.c.b16 %v365, %v364
        %v397 = vpack.c.b16 %v367, %v366
        %v398 = vpack.c.b16 %v369, %v368
        %v399 = vpack.c.b16 %v371, %v370
        %v400 = vpack.c.b16 %v373, %v372
        %v401 = vpack.c.b16 %v375, %v374
        %v402 = vpack.c.b16 %v377, %v376
        %v403 = vpack.c.b16 %v379, %v378
        %v404 = vpack.c.b16 %v381, %v380
        %v405 = vpack.c.b16 %v383, %v382
        %v406 = vpack.c.b16 %v385, %v384
        %v407 = vpack.c.b16 %v387, %v386
        %v408 = vpack.c.b16 %v389, %v388
        %v409 = vpack.c.b16 %v391, %v390
        %v410 = vpack.c.b16 %v393, %v392
        %v411 = vpack.c.b16 %v395, %v394
        %v444 = vunpack.c.l.b16 %v316
        %v445 = vunpack.c.l.b16 %v317
        %v446 = vunpack.c.l.b16 %v318
        %v447 = vunpack.c.l.b16 %v319
        %v448 = vunpack.c.l.b16 %v320
        %v449 = vunpack.c.l.b16 %v321
        %v450 = vunpack.c.l.b16 %v322
        %v451 = vunpack.c.l.b16 %v323
        %v452 = vunpack.c.l.b16 %v324
        %v453 = vunpack.c.l.b16 %v325
        %v454 = vunpack.c.l.b16 %v326
        %v455 = vunpack.c.l.b16 %v327
        %v456 = vunpack.c.l.b16 %v328
        %v457 = vunpack.c.l.b16 %v329
        %v458 = vunpack.c.l.b16 %v330
        %v459 = vunpack.c.l.b16 %v331
        %v460 = vpack.c.b16 %v445, %v444
        %v461 = vpack.c.b16 %v447, %v446
        %v462 = vpack.c.b16 %v449, %v448
        %v463 = vpack.c.b16 %v451, %v450
        %v464 = vpack.c.b16 %v453, %v452
        %v465 = vpack.c.b16 %v455, %v454
        %v466 = vpack.c.b16 %v457, %v456
        %v467 = vpack.c.b16 %v459, %v458
        %476 = vmatprep.subr.bf16.mxu0 0
        %477 = vmatpush1.bf16.msra.mxu0 %v467
        %478 = vmatprep.subr.bf16.mxu0 0
        %479 = vmatpush1.bf16.msra.mxu0 %v466
        %480 = vmatprep.subr.bf16.mxu0 0
        %481 = vmatpush1.bf16.msra.mxu0 %v465
        %482 = vmatprep.subr.bf16.mxu0 0
        %483 = vmatpush1.bf16.msra.mxu0 %v464
        %484 = vmatprep.subr.bf16.mxu0 0
        %485 = vmatpush1.bf16.msra.mxu0 %v463
        %486 = vmatprep.subr.bf16.mxu0 0
        %487 = vmatpush1.bf16.msra.mxu0 %v462
        %488 = vmatprep.subr.bf16.mxu0 0
        %489 = vmatpush1.bf16.msra.mxu0 %v461
        %490 = vmatprep.subr.bf16.mxu0 0
        %491 = vmatpush1.bf16.msra.mxu0 %v460
        %492 = vmatprep.subr.bf16.mxu0 0
        %493 = vmatpush2.bf16.msra.mxu0 0
        %494 = vmatprep.subr.bf16.mxu0 0
        %495 = vmatpush2.bf16.msra.mxu0 0
        %496 = vmatprep.subr.bf16.mxu0 0
        %497 = vmatpush2.bf16.msra.mxu0 0
        %498 = vmatprep.subr.bf16.mxu0 0
        %499 = vmatpush2.bf16.msra.mxu0 0
        %500 = vmatprep.subr.bf16.mxu0 0
        %501 = vmatpush2.bf16.msra.mxu0 0
        %502 = vmatprep.subr.bf16.mxu0 0
        %503 = vmatpush2.bf16.msra.mxu0 0
        %504 = vmatprep.subr.bf16.mxu0 0
        %505 = vmatpush2.bf16.msra.mxu0 0
        %506 = vmatprep.subr.bf16.mxu0 0
        %507 = vmatpush2.bf16.msra.mxu0 0
        %508 = vmatprep.mubr.bf16.mxu0 0
        %509 = vmatmul.mubr.bf16.gmra.mxu0 %v396
        %v510 = vpop.f32.mrf.mxu0
        %v511 = vadd.f32 0.0, %v510
        %v512 = vpop.f32.mrf.mxu0
        %v513 = vpop.f32.mrf.mxu0
        %v514 = vadd.f32 0.0, %v513
        %v515 = vpop.f32.mrf.mxu0
        %516 = vmatprep.mubr.bf16.mxu0 0
        %517 = vmatmul.mubr.bf16.gmra.mxu0 %v397
        %v518 = vpop.f32.mrf.mxu0
        %v519 = vadd.f32 0.0, %v518
        %v520 = vpop.f32.mrf.mxu0
        %v521 = vpop.f32.mrf.mxu0
        %v522 = vadd.f32 0.0, %v521
        %v523 = vpop.f32.mrf.mxu0
        %524 = vmatprep.mubr.bf16.mxu0 0
        %525 = vmatmul.mubr.bf16.gmra.mxu0 %v398
        %v526 = vpop.f32.mrf.mxu0
        %v527 = vadd.f32 0.0, %v526
        %v528 = vpop.f32.mrf.mxu0
        %v529 = vpop.f32.mrf.mxu0
        %v530 = vadd.f32 0.0, %v529
        %v531 = vpop.f32.mrf.mxu0
        %532 = vmatprep.mubr.bf16.mxu0 0
        %533 = vmatmul.mubr.bf16.gmra.mxu0 %v399
        %v534 = vpop.f32.mrf.mxu0
        %v535 = vadd.f32 0.0, %v534
        %v536 = vpop.f32.mrf.mxu0
        %v537 = vpop.f32.mrf.mxu0
        %v538 = vadd.f32 0.0, %v537
        %v539 = vpop.f32.mrf.mxu0
        %540 = vmatprep.mubr.bf16.mxu0 0
        %541 = vmatmul.mubr.bf16.gmra.mxu0 %v400
        %v542 = vpop.f32.mrf.mxu0
        %v543 = vadd.f32 0.0, %v542
        %v544 = vpop.f32.mrf.mxu0
        %v545 = vpop.f32.mrf.mxu0
        %v546 = vadd.f32 0.0, %v545
        %v547 = vpop.f32.mrf.mxu0
        %548 = vmatprep.mubr.bf16.mxu0 0
        %549 = vmatmul.mubr.bf16.gmra.mxu0 %v401
        %v550 = vpop.f32.mrf.mxu0
        %v551 = vadd.f32 0.0, %v550
        %v552 = vpop.f32.mrf.mxu0
        %v553 = vpop.f32.mrf.mxu0
        %v554 = vadd.f32 0.0, %v553
        %v555 = vpop.f32.mrf.mxu0
        %556 = vmatprep.mubr.bf16.mxu0 0
        %557 = vmatmul.mubr.bf16.gmra.mxu0 %v402
        %v558 = vpop.f32.mrf.mxu0
        %v559 = vadd.f32 0.0, %v558
        %v560 = vpop.f32.mrf.mxu0
        %v561 = vpop.f32.mrf.mxu0
        %v562 = vadd.f32 0.0, %v561
        %v563 = vpop.f32.mrf.mxu0
        %564 = vmatprep.mubr.bf16.mxu0 0
        %565 = vmatmul.mubr.bf16.gmra.mxu0 %v403
        %v566 = vpop.f32.mrf.mxu0
        %v567 = vadd.f32 0.0, %v566
        %v568 = vpop.f32.mrf.mxu0
        %v569 = vpop.f32.mrf.mxu0
        %v570 = vadd.f32 0.0, %v569
        %v571 = vpop.f32.mrf.mxu0
        %572 = vmatprep.mubr.bf16.mxu0 0
        %573 = vmatmul.mubr.bf16.gmra.mxu0 %v404
        %v574 = vpop.f32.mrf.mxu0
        %v575 = vadd.f32 0.0, %v574
        %v576 = vpop.f32.mrf.mxu0
        %v577 = vpop.f32.mrf.mxu0
        %v578 = vadd.f32 0.0, %v577
        %v579 = vpop.f32.mrf.mxu0
        %580 = vmatprep.mubr.bf16.mxu0 0
        %581 = vmatmul.mubr.bf16.gmra.mxu0 %v405
        %v582 = vpop.f32.mrf.mxu0
        %v583 = vadd.f32 0.0, %v582
        %v584 = vpop.f32.mrf.mxu0
        %v585 = vpop.f32.mrf.mxu0
        %v586 = vadd.f32 0.0, %v585
        %v587 = vpop.f32.mrf.mxu0
        %588 = vmatprep.mubr.bf16.mxu0 0
        %589 = vmatmul.mubr.bf16.gmra.mxu0 %v406
        %v590 = vpop.f32.mrf.mxu0
        %v591 = vadd.f32 0.0, %v590
        %v592 = vpop.f32.mrf.mxu0
        %v593 = vpop.f32.mrf.mxu0
        %v594 = vadd.f32 0.0, %v593
        %v595 = vpop.f32.mrf.mxu0
        %596 = vmatprep.mubr.bf16.mxu0 0
        %597 = vmatmul.mubr.bf16.gmra.mxu0 %v407
        %v598 = vpop.f32.mrf.mxu0
        %v599 = vadd.f32 0.0, %v598
        %v600 = vpop.f32.mrf.mxu0
        %v601 = vpop.f32.mrf.mxu0
        %v602 = vadd.f32 0.0, %v601
        %v603 = vpop.f32.mrf.mxu0
        %604 = vmatprep.mubr.bf16.mxu0 0
        %605 = vmatmul.mubr.bf16.gmra.mxu0 %v408
        %v606 = vpop.f32.mrf.mxu0
        %v607 = vadd.f32 0.0, %v606
        %v608 = vpop.f32.mrf.mxu0
        %v609 = vpop.f32.mrf.mxu0
        %v610 = vadd.f32 0.0, %v609
        %v611 = vpop.f32.mrf.mxu0
        %612 = vmatprep.mubr.bf16.mxu0 0
        %613 = vmatmul.mubr.bf16.gmra.mxu0 %v409
        %v614 = vpop.f32.mrf.mxu0
        %v615 = vadd.f32 0.0, %v614
        %v616 = vpop.f32.mrf.mxu0
        %v617 = vpop.f32.mrf.mxu0
        %v618 = vadd.f32 0.0, %v617
        %v619 = vpop.f32.mrf.mxu0
        %620 = vmatprep.mubr.bf16.mxu0 0
        %621 = vmatmul.mubr.bf16.gmra.mxu0 %v410
        %v622 = vpop.f32.mrf.mxu0
        %v623 = vadd.f32 0.0, %v622
        %v624 = vpop.f32.mrf.mxu0
        %v625 = vpop.f32.mrf.mxu0
        %v626 = vadd.f32 0.0, %v625
        %v627 = vpop.f32.mrf.mxu0
        %628 = vmatprep.mubr.bf16.mxu0 0
        %629 = vmatmul.mubr.bf16.gmra.mxu0 %v411
        %v630 = vpop.f32.mrf.mxu0
        %v631 = vadd.f32 0.0, %v630
        %v632 = vpop.f32.mrf.mxu0
        %v633 = vpop.f32.mrf.mxu0
        %v634 = vadd.f32 0.0, %v633
        %v635 = vpop.f32.mrf.mxu0
        %636 = vdwg.mxu0
        %v637 = vadd.f32 %v252, %v511
        %v638 = vadd.f32 %v253, %v514
        %v639 = vadd.f32 %v254, %v519
        %v640 = vadd.f32 %v255, %v522
        %v641 = vadd.f32 %v256, %v527
        %v642 = vadd.f32 %v257, %v530
        %v643 = vadd.f32 %v258, %v535
        %v644 = vadd.f32 %v259, %v538
        %v645 = vadd.f32 %v260, %v543
        %v646 = vadd.f32 %v261, %v546
        %v647 = vadd.f32 %v262, %v551
        %v648 = vadd.f32 %v263, %v554
        %v649 = vadd.f32 %v264, %v559
        %v650 = vadd.f32 %v265, %v562
        %v651 = vadd.f32 %v266, %v567
        %v652 = vadd.f32 %v267, %v570
        %v653 = vadd.f32 %v268, %v575
        %v654 = vadd.f32 %v269, %v578
        %v655 = vadd.f32 %v270, %v583
        %v656 = vadd.f32 %v271, %v586
        %v657 = vadd.f32 %v272, %v591
        %v658 = vadd.f32 %v273, %v594
        %v659 = vadd.f32 %v274, %v599
        %v660 = vadd.f32 %v275, %v602
        %v661 = vadd.f32 %v276, %v607
        %v662 = vadd.f32 %v277, %v610
        %v663 = vadd.f32 %v278, %v615
        %v664 = vadd.f32 %v279, %v618
        %v665 = vadd.f32 %v280, %v623
        %v666 = vadd.f32 %v281, %v626
        %v667 = vadd.f32 %v282, %v631
        %v668 = vadd.f32 %v283, %v634
        %669 = vst [vmem:[#allocation2] sm:$0xff] %v637
        %670 = vst [vmem:[#allocation2 + $0x8] sm:$0xff] %v638
        %671 = vst [vmem:[#allocation2 + $0x10] sm:$0xff] %v639
        %672 = vst [vmem:[#allocation2 + $0x18] sm:$0xff] %v640
        %673 = vst [vmem:[#allocation2 + $0x20] sm:$0xff] %v641
        %674 = vst [vmem:[#allocation2 + $0x28] sm:$0xff] %v642
        %675 = vst [vmem:[#allocation2 + $0x30] sm:$0xff] %v643
        %676 = vst [vmem:[#allocation2 + $0x38] sm:$0xff] %v644
        %677 = vst [vmem:[#allocation2 + $0x40] sm:$0xff] %v645
        %678 = vst [vmem:[#allocation2 + $0x48] sm:$0xff] %v646
        %679 = vst [vmem:[#allocation2 + $0x50] sm:$0xff] %v647
        %680 = vst [vmem:[#allocation2 + $0x58] sm:$0xff] %v648
        %681 = vst [vmem:[#allocation2 + $0x60] sm:$0xff] %v649
        %682 = vst [vmem:[#allocation2 + $0x68] sm:$0xff] %v650
        %683 = vst [vmem:[#allocation2 + $0x70] sm:$0xff] %v651
        %684 = vst [vmem:[#allocation2 + $0x78] sm:$0xff] %v652
        %685 = vst [vmem:[#allocation2 + $0x80] sm:$0xff] %v653
        %686 = vst [vmem:[#allocation2 + $0x88] sm:$0xff] %v654
        %687 = vst [vmem:[#allocation2 + $0x90] sm:$0xff] %v655
        %688 = vst [vmem:[#allocation2 + $0x98] sm:$0xff] %v656
        %689 = vst [vmem:[#allocation2 + $0xa0] sm:$0xff] %v657
        %690 = vst [vmem:[#allocation2 + $0xa8] sm:$0xff] %v658
        %691 = vst [vmem:[#allocation2 + $0xb0] sm:$0xff] %v659
        %692 = vst [vmem:[#allocation2 + $0xb8] sm:$0xff] %v660
        %693 = vst [vmem:[#allocation2 + $0xc0] sm:$0xff] %v661
        %694 = vst [vmem:[#allocation2 + $0xc8] sm:$0xff] %v662
        %695 = vst [vmem:[#allocation2 + $0xd0] sm:$0xff] %v663
        %696 = vst [vmem:[#allocation2 + $0xd8] sm:$0xff] %v664
        %697 = vst [vmem:[#allocation2 + $0xe0] sm:$0xff] %v665
        %698 = vst [vmem:[#allocation2 + $0xe8] sm:$0xff] %v666
        %699 = vst [vmem:[#allocation2 + $0xf0] sm:$0xff] %v667
        %700 = vst [vmem:[#allocation2 + $0xf8] sm:$0xff] %v668
        // Predicated region
        $region41: #{tpu_custom_call.1} parent=27 // pred_check
          %p701 = pneg %p216
        $region42: #{tpu_custom_call.1} parent=27 // pred_check_branch
          %703 = sbr.rel (%p701) target = $region44
        $region43: #{tpu_custom_call.1} parent=27 // pred_region
          %v704 = vld [vmem:[#allocation2] sm:$0xff]
          %v705 = vld [vmem:[#allocation2 + $0x8] sm:$0xff]
          %v706 = vld [vmem:[#allocation2 + $0x10] sm:$0xff]
          %v707 = vld [vmem:[#allocation2 + $0x18] sm:$0xff]
          %v708 = vld [vmem:[#allocation2 + $0x20] sm:$0xff]
          %v709 = vld [vmem:[#allocation2 + $0x28] sm:$0xff]
          %v710 = vld [vmem:[#allocation2 + $0x30] sm:$0xff]
          %v711 = vld [vmem:[#allocation2 + $0x38] sm:$0xff]
          %v712 = vld [vmem:[#allocation2 + $0x40] sm:$0xff]
          %v713 = vld [vmem:[#allocation2 + $0x48] sm:$0xff]
          %v714 = vld [vmem:[#allocation2 + $0x50] sm:$0xff]
          %v715 = vld [vmem:[#allocation2 + $0x58] sm:$0xff]
          %v716 = vld [vmem:[#allocation2 + $0x60] sm:$0xff]
          %v717 = vld [vmem:[#allocation2 + $0x68] sm:$0xff]
          %v718 = vld [vmem:[#allocation2 + $0x70] sm:$0xff]
          %v719 = vld [vmem:[#allocation2 + $0x78] sm:$0xff]
          %v720 = vld [vmem:[#allocation2 + $0x80] sm:$0xff]
          %v721 = vld [vmem:[#allocation2 + $0x88] sm:$0xff]
          %v722 = vld [vmem:[#allocation2 + $0x90] sm:$0xff]
          %v723 = vld [vmem:[#allocation2 + $0x98] sm:$0xff]
          %v724 = vld [vmem:[#allocation2 + $0xa0] sm:$0xff]
          %v725 = vld [vmem:[#allocation2 + $0xa8] sm:$0xff]
          %v726 = vld [vmem:[#allocation2 + $0xb0] sm:$0xff]
          %v727 = vld [vmem:[#allocation2 + $0xb8] sm:$0xff]
          %v728 = vld [vmem:[#allocation2 + $0xc0] sm:$0xff]
          %v729 = vld [vmem:[#allocation2 + $0xc8] sm:$0xff]
          %v730 = vld [vmem:[#allocation2 + $0xd0] sm:$0xff]
          %v731 = vld [vmem:[#allocation2 + $0xd8] sm:$0xff]
          %v732 = vld [vmem:[#allocation2 + $0xe0] sm:$0xff]
          %v733 = vld [vmem:[#allocation2 + $0xe8] sm:$0xff]
          %v734 = vld [vmem:[#allocation2 + $0xf0] sm:$0xff]
          %v735 = vld [vmem:[#allocation2 + $0xf8] sm:$0xff]
          %v736 = vmax.f32 %v704, 0.0
          %v737 = vmax.f32 %v705, 0.0
          %v738 = vmax.f32 %v706, 0.0
          %v739 = vmax.f32 %v707, 0.0
          %v740 = vmax.f32 %v708, 0.0
          %v741 = vmax.f32 %v709, 0.0
          %v742 = vmax.f32 %v710, 0.0
          %v743 = vmax.f32 %v711, 0.0
          %v744 = vmax.f32 %v712, 0.0
          %v745 = vmax.f32 %v713, 0.0
          %v746 = vmax.f32 %v714, 0.0
          %v747 = vmax.f32 %v715, 0.0
          %v748 = vmax.f32 %v716, 0.0
          %v749 = vmax.f32 %v717, 0.0
          %v750 = vmax.f32 %v718, 0.0
          %v751 = vmax.f32 %v719, 0.0
          %v752 = vmax.f32 %v720, 0.0
          %v753 = vmax.f32 %v721, 0.0
          %v754 = vmax.f32 %v722, 0.0
          %v755 = vmax.f32 %v723, 0.0
          %v756 = vmax.f32 %v724, 0.0
          %v757 = vmax.f32 %v725, 0.0
          %v758 = vmax.f32 %v726, 0.0
          %v759 = vmax.f32 %v727, 0.0
          %v760 = vmax.f32 %v728, 0.0
          %v761 = vmax.f32 %v729, 0.0
          %v762 = vmax.f32 %v730, 0.0
          %v763 = vmax.f32 %v731, 0.0
          %v764 = vmax.f32 %v732, 0.0
          %v765 = vmax.f32 %v733, 0.0
          %v766 = vmax.f32 %v734, 0.0
          %v767 = vmax.f32 %v735, 0.0
          %768 = vst [vmem:[%s211] sm:$0xff] %v736
          %769 = vst [vmem:[%s211 + $0x8] sm:$0xff] %v737
          %770 = vst [vmem:[%s211 + $0x10] sm:$0xff] %v738
          %771 = vst [vmem:[%s211 + $0x18] sm:$0xff] %v739
          %772 = vst [vmem:[%s211 + $0x20] sm:$0xff] %v740
          %773 = vst [vmem:[%s211 + $0x28] sm:$0xff] %v741
          %774 = vst [vmem:[%s211 + $0x30] sm:$0xff] %v742
          %775 = vst [vmem:[%s211 + $0x38] sm:$0xff] %v743
          %776 = vst [vmem:[%s211 + $0x40] sm:$0xff] %v744
          %777 = vst [vmem:[%s211 + $0x48] sm:$0xff] %v745
          %778 = vst [vmem:[%s211 + $0x50] sm:$0xff] %v746
          %779 = vst [vmem:[%s211 + $0x58] sm:$0xff] %v747
          %780 = vst [vmem:[%s211 + $0x60] sm:$0xff] %v748
          %781 = vst [vmem:[%s211 + $0x68] sm:$0xff] %v749
          %782 = vst [vmem:[%s211 + $0x70] sm:$0xff] %v750
          %783 = vst [vmem:[%s211 + $0x78] sm:$0xff] %v751
          %784 = vst [vmem:[%s211 + $0x80] sm:$0xff] %v752
          %785 = vst [vmem:[%s211 + $0x88] sm:$0xff] %v753
          %786 = vst [vmem:[%s211 + $0x90] sm:$0xff] %v754
          %787 = vst [vmem:[%s211 + $0x98] sm:$0xff] %v755
          %788 = vst [vmem:[%s211 + $0xa0] sm:$0xff] %v756
          %789 = vst [vmem:[%s211 + $0xa8] sm:$0xff] %v757
          %790 = vst [vmem:[%s211 + $0xb0] sm:$0xff] %v758
          %791 = vst [vmem:[%s211 + $0xb8] sm:$0xff] %v759
          %792 = vst [vmem:[%s211 + $0xc0] sm:$0xff] %v760
          %793 = vst [vmem:[%s211 + $0xc8] sm:$0xff] %v761
          %794 = vst [vmem:[%s211 + $0xd0] sm:$0xff] %v762
          %795 = vst [vmem:[%s211 + $0xd8] sm:$0xff] %v763
          %796 = vst [vmem:[%s211 + $0xe0] sm:$0xff] %v764
          %797 = vst [vmem:[%s211 + $0xe8] sm:$0xff] %v765
          %798 = vst [vmem:[%s211 + $0xf0] sm:$0xff] %v766
          %799 = vst [vmem:[%s211 + $0xf8] sm:$0xff] %v767
        $region44: #{tpu_custom_call.1} parent=27 // pred_fallthru
          _
        %s800 = sand.u32 %s105, 1
        %s801 = scalar_lea.sflag [#allocation5], %s800
        %s802 = sand.u32 %s105, 1
        %s803 = smul.addr %s802, 256
        %s804 = scalar_lea.vmem [#allocation8], %s803
        // Predicated region
        $region45: #{tpu_custom_call.1} parent=27 // pred_check
          %p805 = pneg %p115
        $region46: #{tpu_custom_call.1} parent=27 // pred_check_branch
          %807 = sbr.rel (%p805) target = $region48
        $region47: #{tpu_custom_call.1} parent=27 // pred_region
          %s808 = smul.u32 32, %s25
          %s810 = ssub.s32 4096, 4096
          %811 = vsyncadd %s801, %s810
          %s812 = sadd.s32 %s26, %s808
          %s813 = smul.addr %s812, 128
          %s814 = scalar_lea.hbm %s2, %s813
          %s815 = sshll.u32 %s804, 4
          %s816 = int_to_ptr.vmem [resolvable:$true] %s815
          %821 = dma.vmem_to_hbm [thread:$0]  %s816, 4096, %s814, %s801, 128, 128, 8
        $region48: #{tpu_custom_call.1} parent=27 // pred_fallthru
          _
      $region28: #{tpu_custom_call.1} parent=5 // pred_fallthru
        _
      %p822 = scmp.le.s32.totalorder 2, %s15
      // Predicated region
      $region49: #{tpu_custom_call.1} parent=5 // pred_check
        %p823 = pneg %p822
      $region50: #{tpu_custom_call.1} parent=5 // pred_check_branch
        %825 = sbr.rel (%p823) target = $region52
      $region51: #{tpu_custom_call.1} parent=5 // pred_region
        %s826 = ssub.s32 %s15, 2
        // Predicated region
        $region53: #{tpu_custom_call.1} parent=51 // pred_check
          %p827 = pneg %p121
        $region54: #{tpu_custom_call.1} parent=51 // pred_check_branch
          %829 = sbr.rel (%p827) target = $region56
        $region55: #{tpu_custom_call.1} parent=51 // pred_region
          %s830 = sand.u32 %s106, 1
          %s831 = scalar_lea.sflag [#allocation5], %s830
          %s832 = sand.u32 %s106, 1
          %s833 = smul.addr %s832, 256
          %s834 = scalar_lea.vmem [#allocation8], %s833
          %835 = dma.done %s831, 4096
        $region56: #{tpu_custom_call.1} parent=51 // pred_fallthru
          _
      $region52: #{tpu_custom_call.1} parent=5 // pred_fallthru
        _
    $region6: #{tpu_custom_call.1} parent=1 // loop_footer
      %s19 = sadd.s32 1, %s15
    $region7: #{tpu_custom_call.1} parent=1 // loop_footer_branch
      %14 = sbr.rel target = $region3
    $region8: #{tpu_custom_call.1} parent=1 // loop_exit
      _
    %836 = vsyncpa [#allocation4], 1
    %s837 = scalar_lea.sflag [#allocation4], 1
    %838 = vsyncpa %s837, 1
    %839 = vsyncpa [#allocation7], 1
    %840 = vsyncpa [#allocation5], 1
    %s841 = scalar_lea.sflag [#allocation5], 1
    %842 = vsyncpa %s841, 1

</llo_original>
